<compile_context>
chip_gen: v7x
topology: tpu7x:2x2x1
jax: 0.10.0
libtpu: 0.0.40
codegen_flags: <defaults>
</compile_context>

<pallas_src>
import functools

import jax
import jax.numpy as jnp
from jax.experimental import pallas as pl
from jax.experimental.pallas import tpu as pltpu


def _round_up(x, m):
    return ((x + m - 1) // m) * m


def _critic_kernel(obs_ref, act_ref, w1_ref, b1_ref, w2_ref, b2_ref,
                   w3_ref, b3_ref, w4_ref, b4_ref, out_ref, cat_ref,
                   *, h1p, act_dim):
    # obs_ref: (tm, obs_dim) f32, act_ref: (tm, act_dim) f32 (full-extent feature dims).
    tm = cat_ref.shape[0]
    act_grp = cat_ref.shape[1] - h1p

    # fc1s + ReLU (bf16 cast in-kernel; padded w1 columns are zero so padded xs
    # columns end up exactly 0 after ReLU(0 + 0)).
    obs = obs_ref[...].astype(jnp.bfloat16)
    xs = jnp.dot(obs, w1_ref[...], preferred_element_type=jnp.float32) + b1_ref[...]
    xs = jnp.maximum(xs, 0.0).astype(jnp.bfloat16)

    # Assemble cat([xs, action]) in a lane-aligned VMEM scratch:
    #   lanes [0 : h1p)                 = xs
    #   lanes [h1p : h1p + act_dim)     = action (bf16)
    #   lanes [h1p + act_dim : )        = zero padding (re-zeroed every step so
    #                                      grid steps stay independent / parallel)
    cat_ref[:, :h1p] = xs
    if act_grp > act_dim:
        cat_ref[:, h1p + act_dim:] = jnp.zeros((tm, act_grp - act_dim), jnp.bfloat16)
    cat_ref[:, h1p:h1p + act_dim] = act_ref[...].astype(jnp.bfloat16)

    # fc2 on cat([xs, action]) + ReLU -- single fused MXU pass against the
    # stacked [w2s ; w2a] weight (zero rows for all padding lanes).
    h2 = jnp.dot(cat_ref[...], w2_ref[...], preferred_element_type=jnp.float32) + b2_ref[...]
    h2 = jnp.maximum(h2, 0.0).astype(jnp.bfloat16)

    # fc3 + ReLU
    h3 = jnp.dot(h2, w3_ref[...], preferred_element_type=jnp.float32) + b3_ref[...]
    h3 = jnp.maximum(h3, 0.0).astype(jnp.bfloat16)

    # Final linear: w4 padded to 128 lanes keeps the matmul aligned, but only
    # column 0 is real and only column 0 is written back (out block is (tm, 1)).
    q = jnp.dot(h3, w4_ref[...], preferred_element_type=jnp.float32) + b4_ref[0, 0]
    out_ref[...] = q[:, :1]


def critic_forward(obs, action, packed, *, block_m=512):
    """obs: (B, obs_dim) f32, action: (B, action_dim) f32 -> (B, 1) f32."""
    B = obs.shape[0]
    obs_dim = packed["obs_dim"]
    act_dim = packed["act_dim"]
    h1p = packed["h1p"]
    h2p = packed["h2p"]
    act_grp = packed["act_grp"]

    # Batch tile: large enough to amortize per-grid-step overhead, but clamped
    # so there are >=2 grid steps whenever B allows (v7x megacore sharding),
    # and a 16-row multiple for bf16 sublane packing.
    tm = min(block_m, max(16, _round_up((B + 1) // 2, 16)))
    b_pad = _round_up(B, tm)
    grid_m = b_pad // tm

    if b_pad != B:  # only pad batch rows when the tile does not divide B
        obs = jnp.pad(obs, ((0, b_pad - B), (0, 0)))
        action = jnp.pad(action, ((0, b_pad - B), (0, 0)))

    kernel = functools.partial(_critic_kernel, h1p=h1p, act_dim=act_dim)
    const = lambda i: (0, 0)

    weight_elems = (obs_dim * h1p + (h1p + act_grp) * h2p + h2p * h2p + h2p * 128)
    flops = 2 * b_pad * (obs_dim * h1p + (h1p + act_grp) * h2p + h2p * h2p + h2p * 128)
    bytes_accessed = (b_pad * (obs_dim + act_dim) * 4    # obs + action in
                      + b_pad * 4                        # q out
                      + 2 * weight_elems                 # bf16 weights
                      + 4 * (h1p + 2 * h2p + 1))         # f32 biases

    out = pl.pallas_call(
        kernel,
        out_shape=jax.ShapeDtypeStruct((b_pad, 1), jnp.float32),
        grid=(grid_m,),
        in_specs=[
            pl.BlockSpec((tm, obs_dim), lambda i: (i, 0)),        # obs   (per-tile)
            pl.BlockSpec((tm, act_dim), lambda i: (i, 0)),        # action(per-tile)
            pl.BlockSpec((obs_dim, h1p), const),                  # w1    (resident)
            pl.BlockSpec((1, h1p), const),                        # b1
            pl.BlockSpec((h1p + act_grp, h2p), const),            # w2 = [w2s; w2a]
            pl.BlockSpec((1, h2p), const),                        # b2
            pl.BlockSpec((h2p, h2p), const),                      # w3
            pl.BlockSpec((1, h2p), const),                        # b3
            pl.BlockSpec((h2p, 128), const),                      # w4 (lane-aligned)
            pl.BlockSpec(memory_space=pltpu.MemorySpace.SMEM),    # b4 scalar
        ],
        out_specs=pl.BlockSpec((tm, 1), lambda i: (i, 0)),
        scratch_shapes=[pltpu.VMEM((tm, h1p + act_grp), jnp.bfloat16)],
        compiler_params=pltpu.CompilerParams(
            dimension_semantics=("parallel",),
            vmem_limit_bytes=32 * 1024 * 1024,
        ),
        cost_estimate=pl.CostEstimate(
            flops=flops, transcendentals=0, bytes_accessed=bytes_accessed),
    )(obs, action, packed["w1"], packed["b1"], packed["w2"], packed["b2"],
      packed["w3"], packed["b3"], packed["w4"], packed["b4"])

    return out[:B]


def xavier_uniform(key, fan_in, fan_out):
    # Matches torch.nn.init.xavier_uniform_ bounds; stored as (in, out).
    bound = (6.0 / (fan_in + fan_out)) ** 0.5
    return jax.random.uniform(key, (fan_in, fan_out), jnp.float32, -bound, bound)


def init_params(key, obs_dim, action_dim, hidden1=400, hidden2=300):
    """Logical (unpadded, f32) parameters matching the PyTorch init scheme."""
    k1, k2, k3, k4 = jax.random.split(key, 4)
    w1 = xavier_uniform(k1, obs_dim, hidden1)
    b1 = jnp.full((1, hidden1), 0.01, jnp.float32)

    # fc2 in_features = hidden1 + action_dim; split rows into xs part / action part.
    w2_full = xavier_uniform(k2, hidden1 + action_dim, hidden2)
    w2s = w2_full[:hidden1, :]
    w2a = w2_full[hidden1:, :]
    b2 = jnp.full((1, hidden2), 0.01, jnp.float32)

    w3 = xavier_uniform(k3, hidden2, hidden2)
    b3 = jnp.full((1, hidden2), 0.01, jnp.float32)

    w4 = xavier_uniform(k4, hidden2, 1)
    b4 = jnp.full((1, 1), 0.01, jnp.float32)

    return (w1, b1, w2s, w2a, b2, w3, b3, w4, b4)


def pack_params(params, obs_dim, action_dim, hidden1, hidden2):
    """Pad feature dims to 128 multiples, stack fc2 weights, cast to bf16."""
    w1, b1, w2s, w2a, b2, w3, b3, w4, b4 = params
    h1p = _round_up(hidden1, 128)
    h2p = _round_up(hidden2, 128)
    act_grp = _round_up(action_dim, 128)
    bf = jnp.bfloat16

    w1p = jnp.zeros((obs_dim, h1p), bf).at[:, :hidden1].set(w1.astype(bf))
    b1p = jnp.zeros((1, h1p), jnp.float32).at[:, :hidden1].set(b1)

    # Stacked fc2 weight: xs block on rows [0:h1p), action block (128-lane
    # aligned) on rows [h1p : h1p+act_dim); all padding rows are zero so the
    # fused single matmul equals the concat matmul exactly.
    w2p = (jnp.zeros((h1p + act_grp, h2p), bf)
           .at[:hidden1, :hidden2].set(w2s.astype(bf))
           .at[h1p:h1p + action_dim, :hidden2].set(w2a.astype(bf)))
    b2p = jnp.zeros((1, h2p), jnp.float32).at[:, :hidden2].set(b2)

    w3p = jnp.zeros((h2p, h2p), bf).at[:hidden2, :hidden2].set(w3.astype(bf))
    b3p = jnp.zeros((1, h2p), jnp.float32).at[:, :hidden2].set(b3)
    w4p = jnp.zeros((h2p, 128), bf).at[:hidden2, :1].set(w4.astype(bf))
    b4s = b4.astype(jnp.float32).reshape(1, 1)

    return dict(w1=w1p, b1=b1p, w2=w2p, b2=b2p, w3=w3p, b3=b3p, w4=w4p, b4=b4s,
                obs_dim=obs_dim, act_dim=action_dim,
                h1p=h1p, h2p=h2p, act_grp=act_grp)


def critic_reference(obs, action, params):
    """Pure-JAX reference mirroring the kernel's bf16-operand / f32-accumulate math."""
    w1, b1, w2s, w2a, b2, w3, b3, w4, b4 = params
    bf = jnp.bfloat16

    def mm(a, w):
        return jnp.dot(a.astype(bf), w.astype(bf), preferred_element_type=jnp.float32)

    xs = jnp.maximum(mm(obs, w1) + b1, 0.0)
    h2 = jnp.maximum(mm(xs, w2s) + mm(action, w2a) + b2, 0.0)
    h3 = jnp.maximum(mm(h2, w3) + b3, 0.0)
    return mm(h3, w4) + b4


if __name__ == "__main__":
    # TODO(synk): only the forward pass is implemented; the Adam optimizer /
    # training step of the module is out of scope for this kernel.
    B, OBS_DIM, ACT_DIM = 8, 16, 4
    HIDDEN1, HIDDEN2 = 32, 32   # small stand-ins for the module's 400/300

    key = jax.random.PRNGKey(0)
    k_obs, k_act, k_params = jax.random.split(key, 3)

    obs = jax.random.normal(k_obs, (B, OBS_DIM), jnp.float32)
    action = jax.random.uniform(k_act, (B, ACT_DIM), jnp.float32, -1.0, 1.0)

    params = init_params(k_params, OBS_DIM, ACT_DIM, HIDDEN1, HIDDEN2)
    packed = pack_params(params, OBS_DIM, ACT_DIM, HIDDEN1, HIDDEN2)

    q = critic_forward(obs, action, packed)
    q = jax.block_until_ready(q)

    q_ref = critic_reference(obs, action, params)
    assert q.shape == (B, 1)
    assert jnp.allclose(q, q_ref, atol=2e-3, rtol=2e-3), "mismatch vs JAX reference"

    print("KERNEL_OK")
</pallas_src>

<mosaic_0001>
module attributes {stable_mosaic.version = 11 : i64} {
  func.func @_critic_kernel(%arg0: i32, %arg1: memref<16x16xf32, #tpu.memory_space<vmem>>, %arg2: memref<16x4xf32, #tpu.memory_space<vmem>>, %arg3: memref<16x128xbf16, #tpu.memory_space<vmem>>, %arg4: memref<1x128xf32, #tpu.memory_space<vmem>>, %arg5: memref<256x128xbf16, #tpu.memory_space<vmem>>, %arg6: memref<1x128xf32, #tpu.memory_space<vmem>>, %arg7: memref<128x128xbf16, #tpu.memory_space<vmem>>, %arg8: memref<1x128xf32, #tpu.memory_space<vmem>>, %arg9: memref<128x128xbf16, #tpu.memory_space<vmem>>, %arg10: memref<1x1xf32, #tpu.memory_space<smem>>, %arg11: memref<16x1xf32, #tpu.memory_space<vmem>>, %arg12: memref<16x256xbf16, #tpu.memory_space<vmem>>) attributes {dimension_semantics = [#tpu.dimension_semantics<parallel>], iteration_bounds = array<i64: 1>, scalar_prefetch = 0 : i64, scratch_operands = 1 : i64, tpu.core_type = #tpu.core_type<tc>, window_params = [{transform_indices = @transform_0, window_bounds = array<i64: 16, 16>}, {transform_indices = @transform_1, window_bounds = array<i64: 16, 4>}, {pipeline_mode = #tpu.pipeline_mode<synchronous>, transform_indices = @transform_2, window_bounds = array<i64: 16, 128>}, {pipeline_mode = #tpu.pipeline_mode<synchronous>, transform_indices = @transform_3, window_bounds = array<i64: 1, 128>}, {pipeline_mode = #tpu.pipeline_mode<synchronous>, transform_indices = @transform_4, window_bounds = array<i64: 256, 128>}, {pipeline_mode = #tpu.pipeline_mode<synchronous>, transform_indices = @transform_5, window_bounds = array<i64: 1, 128>}, {pipeline_mode = #tpu.pipeline_mode<synchronous>, transform_indices = @transform_6, window_bounds = array<i64: 128, 128>}, {pipeline_mode = #tpu.pipeline_mode<synchronous>, transform_indices = @transform_7, window_bounds = array<i64: 1, 128>}, {pipeline_mode = #tpu.pipeline_mode<synchronous>, transform_indices = @transform_8, window_bounds = array<i64: 128, 128>}, {transform_indices = @transform_9, window_bounds = array<i64: 1, 1>}, {transform_indices = @transform_10, window_bounds = array<i64: 16, 1>}]} {
    %c0 = arith.constant 0 : index
    %c0_0 = arith.constant 0 : index
    %0 = vector.load %arg1[%c0, %c0_0] : memref<16x16xf32, #tpu.memory_space<vmem>>, vector<16x16xf32>
    %1 = arith.truncf %0 : vector<16x16xf32> to vector<16x16xbf16>
    %c0_1 = arith.constant 0 : index
    %c0_2 = arith.constant 0 : index
    %2 = vector.load %arg3[%c0_1, %c0_2] : memref<16x128xbf16, #tpu.memory_space<vmem>>, vector<16x128xbf16>
    %cst = arith.constant dense<0.000000e+00> : vector<16x128xf32>
    %3 = tpu.matmul %1, %2, %cst {dimension_numbers = #tpu.dot_dimension_numbers<[1], [0], [0], [1], [0, 0, 1, 1], [], []>} : vector<16x16xbf16>, vector<16x128xbf16>, vector<16x128xf32> -> vector<16x128xf32>
    %c0_3 = arith.constant 0 : index
    %c0_4 = arith.constant 0 : index
    %4 = vector.load %arg4[%c0_3, %c0_4] : memref<1x128xf32, #tpu.memory_space<vmem>>, vector<1x128xf32>
    %5 = vector.broadcast %4 : vector<1x128xf32> to vector<16x128xf32>
    %6 = arith.addf %3, %5 : vector<16x128xf32>
    %cst_5 = arith.constant 0.000000e+00 : f32
    %7 = vector.broadcast %cst_5 : f32 to vector<16x128xf32>
    %8 = arith.maximumf %6, %7 : vector<16x128xf32>
    %9 = arith.truncf %8 : vector<16x128xf32> to vector<16x128xbf16>
    %c0_6 = arith.constant 0 : index
    %c0_7 = arith.constant 0 : index
    %10 = vector.load %arg12[%c0_6, %c0_7] : memref<16x256xbf16, #tpu.memory_space<vmem>>, vector<16x128xbf16>
    tpu.vector_store %arg12[%c0_6, %c0_7], %9 {strides = array<i32>} : memref<16x256xbf16, #tpu.memory_space<vmem>>, vector<16x128xbf16>,
    %cst_8 = arith.constant 0.000000e+00 : bf16
    %11 = vector.broadcast %cst_8 : bf16 to vector<16x124xbf16>
    %c0_9 = arith.constant 0 : index
    %c132 = arith.constant 132 : index
    %12 = vector.load %arg12[%c0_9, %c132] : memref<16x256xbf16, #tpu.memory_space<vmem>>, vector<16x124xbf16>
    tpu.vector_store %arg12[%c0_9, %c132], %11 {strides = array<i32>} : memref<16x256xbf16, #tpu.memory_space<vmem>>, vector<16x124xbf16>,
    %c0_10 = arith.constant 0 : index
    %c0_11 = arith.constant 0 : index
    %13 = vector.load %arg2[%c0_10, %c0_11] : memref<16x4xf32, #tpu.memory_space<vmem>>, vector<16x4xf32>
    %14 = arith.truncf %13 : vector<16x4xf32> to vector<16x4xbf16>
    %c0_12 = arith.constant 0 : index
    %c128 = arith.constant 128 : index
    %15 = vector.load %arg12[%c0_12, %c128] : memref<16x256xbf16, #tpu.memory_space<vmem>>, vector<16x4xbf16>
    tpu.vector_store %arg12[%c0_12, %c128], %14 {strides = array<i32>} : memref<16x256xbf16, #tpu.memory_space<vmem>>, vector<16x4xbf16>,
    %c0_13 = arith.constant 0 : index
    %c0_14 = arith.constant 0 : index
    %16 = vector.load %arg12[%c0_13, %c0_14] : memref<16x256xbf16, #tpu.memory_space<vmem>>, vector<16x256xbf16>
    %c0_15 = arith.constant 0 : index
    %c0_16 = arith.constant 0 : index
    %17 = vector.load %arg5[%c0_15, %c0_16] : memref<256x128xbf16, #tpu.memory_space<vmem>>, vector<256x128xbf16>
    %cst_17 = arith.constant dense<0.000000e+00> : vector<16x128xf32>
    %18 = tpu.matmul %16, %17, %cst_17 {dimension_numbers = #tpu.dot_dimension_numbers<[1], [0], [0], [1], [0, 0, 1, 1], [], []>} : vector<16x256xbf16>, vector<256x128xbf16>, vector<16x128xf32> -> vector<16x128xf32>
    %c0_18 = arith.constant 0 : index
    %c0_19 = arith.constant 0 : index
    %19 = vector.load %arg6[%c0_18, %c0_19] : memref<1x128xf32, #tpu.memory_space<vmem>>, vector<1x128xf32>
    %20 = vector.broadcast %19 : vector<1x128xf32> to vector<16x128xf32>
    %21 = arith.addf %18, %20 : vector<16x128xf32>
    %cst_20 = arith.constant 0.000000e+00 : f32
    %22 = vector.broadcast %cst_20 : f32 to vector<16x128xf32>
    %23 = arith.maximumf %21, %22 : vector<16x128xf32>
    %24 = arith.truncf %23 : vector<16x128xf32> to vector<16x128xbf16>
    %c0_21 = arith.constant 0 : index
    %c0_22 = arith.constant 0 : index
    %25 = vector.load %arg7[%c0_21, %c0_22] : memref<128x128xbf16, #tpu.memory_space<vmem>>, vector<128x128xbf16>
    %cst_23 = arith.constant dense<0.000000e+00> : vector<16x128xf32>
    %26 = tpu.matmul %24, %25, %cst_23 {dimension_numbers = #tpu.dot_dimension_numbers<[1], [0], [0], [1], [0, 0, 1, 1], [], []>} : vector<16x128xbf16>, vector<128x128xbf16>, vector<16x128xf32> -> vector<16x128xf32>
    %c0_24 = arith.constant 0 : index
    %c0_25 = arith.constant 0 : index
    %27 = vector.load %arg8[%c0_24, %c0_25] : memref<1x128xf32, #tpu.memory_space<vmem>>, vector<1x128xf32>
    %28 = vector.broadcast %27 : vector<1x128xf32> to vector<16x128xf32>
    %29 = arith.addf %26, %28 : vector<16x128xf32>
    %cst_26 = arith.constant 0.000000e+00 : f32
    %30 = vector.broadcast %cst_26 : f32 to vector<16x128xf32>
    %31 = arith.maximumf %29, %30 : vector<16x128xf32>
    %32 = arith.truncf %31 : vector<16x128xf32> to vector<16x128xbf16>
    %c0_27 = arith.constant 0 : index
    %c0_28 = arith.constant 0 : index
    %33 = vector.load %arg9[%c0_27, %c0_28] : memref<128x128xbf16, #tpu.memory_space<vmem>>, vector<128x128xbf16>
    %cst_29 = arith.constant dense<0.000000e+00> : vector<16x128xf32>
    %34 = tpu.matmul %32, %33, %cst_29 {dimension_numbers = #tpu.dot_dimension_numbers<[1], [0], [0], [1], [0, 0, 1, 1], [], []>} : vector<16x128xbf16>, vector<128x128xbf16>, vector<16x128xf32> -> vector<16x128xf32>
    %c0_30 = arith.constant 0 : index
    %c0_31 = arith.constant 0 : index
    %35 = memref.load %arg10[%c0_30, %c0_31] : memref<1x1xf32, #tpu.memory_space<smem>>
    %36 = vector.broadcast %35 : f32 to vector<16x128xf32>
    %37 = arith.addf %34, %36 : vector<16x128xf32>
    %38 = vector.extract_strided_slice %37 {offsets = [0, 0], sizes = [16, 1], strides = [1, 1]} : vector<16x128xf32> to vector<16x1xf32>
    %c0_32 = arith.constant 0 : index
    %c0_33 = arith.constant 0 : index
    %39 = vector.load %arg11[%c0_32, %c0_33] : memref<16x1xf32, #tpu.memory_space<vmem>>, vector<16x1xf32>
    tpu.vector_store %arg11[%c0_32, %c0_33], %38 {strides = array<i32>} : memref<16x1xf32, #tpu.memory_space<vmem>>, vector<16x1xf32>,
    return
  }
  func.func @transform_0(%arg0: i32) -> (i32, i32) {
    %c0_i32 = arith.constant 0 : i32
    %c0_i32_0 = arith.constant 0 : i32
    return %arg0, %c0_i32 : i32, i32
  }
  func.func @transform_1(%arg0: i32) -> (i32, i32) {
    %c0_i32 = arith.constant 0 : i32
    %c0_i32_0 = arith.constant 0 : i32
    return %arg0, %c0_i32 : i32, i32
  }
  func.func @transform_2(%arg0: i32) -> (i32, i32) {
    %c0_i32 = arith.constant 0 : i32
    %c0_i32_0 = arith.constant 0 : i32
    %c0_i32_1 = arith.constant 0 : i32
    return %c0_i32, %c0_i32_0 : i32, i32
  }
  func.func @transform_3(%arg0: i32) -> (i32, i32) {
    %c0_i32 = arith.constant 0 : i32
    %c0_i32_0 = arith.constant 0 : i32
    %c0_i32_1 = arith.constant 0 : i32
    return %c0_i32, %c0_i32_0 : i32, i32
  }
  func.func @transform_4(%arg0: i32) -> (i32, i32) {
    %c0_i32 = arith.constant 0 : i32
    %c0_i32_0 = arith.constant 0 : i32
    %c0_i32_1 = arith.constant 0 : i32
    return %c0_i32, %c0_i32_0 : i32, i32
  }
  func.func @transform_5(%arg0: i32) -> (i32, i32) {
    %c0_i32 = arith.constant 0 : i32
    %c0_i32_0 = arith.constant 0 : i32
    %c0_i32_1 = arith.constant 0 : i32
    return %c0_i32, %c0_i32_0 : i32, i32
  }
  func.func @transform_6(%arg0: i32) -> (i32, i32) {
    %c0_i32 = arith.constant 0 : i32
    %c0_i32_0 = arith.constant 0 : i32
    %c0_i32_1 = arith.constant 0 : i32
    return %c0_i32, %c0_i32_0 : i32, i32
  }
  func.func @transform_7(%arg0: i32) -> (i32, i32) {
    %c0_i32 = arith.constant 0 : i32
    %c0_i32_0 = arith.constant 0 : i32
    %c0_i32_1 = arith.constant 0 : i32
    return %c0_i32, %c0_i32_0 : i32, i32
  }
  func.func @transform_8(%arg0: i32) -> (i32, i32) {
    %c0_i32 = arith.constant 0 : i32
    %c0_i32_0 = arith.constant 0 : i32
    %c0_i32_1 = arith.constant 0 : i32
    return %c0_i32, %c0_i32_0 : i32, i32
  }
  func.func @transform_9(%arg0: i32) -> (i32, i32) {
    %c0_i32 = arith.constant 0 : i32
    %c0_i32_0 = arith.constant 0 : i32
    %c0_i32_1 = arith.constant 0 : i32
    return %c0_i32, %c0_i32_0 : i32, i32
  }
  func.func @transform_10(%arg0: i32) -> (i32, i32) {
    %c0_i32 = arith.constant 0 : i32
    %c0_i32_0 = arith.constant 0 : i32
    return %arg0, %c0_i32 : i32, i32
  }
}

</mosaic_0001>

<llo_original>
// kernel: tpu_custom_call.1
$region0: #{tpu_custom_call.1}
  #allocation0 [shape = 'u32[]', space=smem, size = 0x4, offset = 0x4, fixed_abs, tag = 'smem constant byte address 0x4 - core index']
  #allocation1 [shape = 'u32[144,128]{1,0:T(1,128)}', space=vmem, size = 0x12000, scoped, tag = 'internal scratch']
  #allocation2 [shape = 'bf16[16,256]{1,0:T(16,128)(2,1)}', space=vmem, size = 0x2000, scoped, tag = 'scratch operand']
  #allocation3 [shape = 'f32[1,1]{1,0:T(1,128)S(6)}', space=smem, size = 0x200, scoped, tag = 'scoped memory for tpu_custom_call.1']
  %s0 = inlined_call_operand.vmem [shape: f32[16,16], index: 0, kind: input, shape index: {}]
  %s1 = inlined_call_operand.vmem [shape: f32[16,4], index: 1, kind: input, shape index: {}]
  %s2 = inlined_call_operand.vmem [shape: bf16[16,128], index: 2, kind: input, shape index: {}]
  %s3 = inlined_call_operand.vmem [shape: f32[1,128], index: 3, kind: input, shape index: {}]
  %s4 = inlined_call_operand.hbm [shape: bf16[256,128], index: 4, kind: input, shape index: {}]
  %s5 = inlined_call_operand.vmem [shape: f32[1,128], index: 5, kind: input, shape index: {}]
  %s6 = inlined_call_operand.hbm [shape: bf16[128,128], index: 6, kind: input, shape index: {}]
  %s7 = inlined_call_operand.vmem [shape: f32[1,128], index: 7, kind: input, shape index: {}]
  %s8 = inlined_call_operand.hbm [shape: bf16[128,128], index: 8, kind: input, shape index: {}]
  %s9 = inlined_call_operand.<no memory space> [shape: f32[1,1], index: 9, kind: input, shape index: {}]
  %s10 = inlined_call_operand.vmem [shape: f32[16,1], index: 10, kind: output, shape index: {}]
  %s11 = sld [smem:[#allocation0]]
  $region62: #{tpu_custom_call.1} parent=0
    _
  %s13 = ssub.s32 1, %s11
  %s14 = scalar_select 0, %s13, %s11
  %15 = sst [smem:[#allocation3]] %s9
  $region1: #{tpu_custom_call.1} parent=0
    #allocation4 [shape = 'u8[65536]{0}', space=vmem, size = 0x10000, scoped, tag = 'input window, operand 4, single buffered']
    #allocation5 [shape = 's32[1]{0}', space=sflag, size = 0x4, scoped, tag = 'scoped memory for tpu_custom_call.1']
    #allocation6 [shape = 'u8[32768]{0}', space=vmem, size = 0x8000, scoped, tag = 'input window, operand 6, single buffered']
    #allocation7 [shape = 's32[1]{0}', space=sflag, size = 0x4, scoped, tag = 'scoped memory for tpu_custom_call.1']
    #allocation8 [shape = 'u8[32768]{0}', space=vmem, size = 0x8000, scoped, tag = 'input window, operand 8, single buffered']
    %16 = vsyncpa [#allocation5], 0
    %17 = vsyncpa [#allocation7], 0
    // Predicated region
    $region2: #{tpu_custom_call.1} parent=1 // pred_check
      _
    $region3: #{tpu_custom_call.1} parent=1 // pred_check_branch
      %19 = sbr.rel (0) target = $region5
    $region4: #{tpu_custom_call.1} parent=1 // pred_region
      _
    $region5: #{tpu_custom_call.1} parent=1 // pred_fallthru
      _
    // Predicated region
    $region6: #{tpu_custom_call.1} parent=1 // pred_check
      _
    $region7: #{tpu_custom_call.1} parent=1 // pred_check_branch
      %21 = sbr.rel (0) target = $region9
    $region8: #{tpu_custom_call.1} parent=1 // pred_region
      _
    $region9: #{tpu_custom_call.1} parent=1 // pred_fallthru
      _
    // Predicated region
    $region10: #{tpu_custom_call.1} parent=1 // pred_check
      _
    $region11: #{tpu_custom_call.1} parent=1 // pred_check_branch
      %23 = sbr.rel (0) target = $region13
    $region12: #{tpu_custom_call.1} parent=1 // pred_region
      _
    $region13: #{tpu_custom_call.1} parent=1 // pred_fallthru
      _
    // Predicated region
    $region14: #{tpu_custom_call.1} parent=1 // pred_check
      _
    $region15: #{tpu_custom_call.1} parent=1 // pred_check_branch
      %25 = sbr.rel (0) target = $region17
    $region16: #{tpu_custom_call.1} parent=1 // pred_region
      _
    $region17: #{tpu_custom_call.1} parent=1 // pred_fallthru
      _
    // Predicated region
    $region18: #{tpu_custom_call.1} parent=1 // pred_check
      _
    $region19: #{tpu_custom_call.1} parent=1 // pred_check_branch
      %27 = sbr.rel (0) target = $region21
    $region20: #{tpu_custom_call.1} parent=1 // pred_region
      %s29 = ssub.s32 2048, 2048
      %30 = vsyncadd [#allocation5], %s29
      %s31 = sshll.u32 [#allocation4], 4
      %s32 = int_to_ptr.vmem [resolvable:$true] %s31
      %37 = dma.hbm_to_vmem [thread:$0]  %s4, 2048, %s32, [#allocation5], 64, 64, 4
    $region21: #{tpu_custom_call.1} parent=1 // pred_fallthru
      _
    // Predicated region
    $region22: #{tpu_custom_call.1} parent=1 // pred_check
      _
    $region23: #{tpu_custom_call.1} parent=1 // pred_check_branch
      %39 = sbr.rel (0) target = $region25
    $region24: #{tpu_custom_call.1} parent=1 // pred_region
      _
    $region25: #{tpu_custom_call.1} parent=1 // pred_fallthru
      _
    // Predicated region
    $region26: #{tpu_custom_call.1} parent=1 // pred_check
      _
    $region27: #{tpu_custom_call.1} parent=1 // pred_check_branch
      %41 = sbr.rel (0) target = $region29
    $region28: #{tpu_custom_call.1} parent=1 // pred_region
      %s43 = ssub.s32 1024, 1024
      %44 = vsyncadd [#allocation7], %s43
      %s45 = sshll.u32 [#allocation6], 4
      %s46 = int_to_ptr.vmem [resolvable:$true] %s45
      %51 = dma.hbm_to_vmem [thread:$0]  %s6, 1024, %s46, [#allocation7], 64, 64, 4
    $region29: #{tpu_custom_call.1} parent=1 // pred_fallthru
      _
    // Predicated region
    $region30: #{tpu_custom_call.1} parent=1 // pred_check
      _
    $region31: #{tpu_custom_call.1} parent=1 // pred_check_branch
      %53 = sbr.rel (0) target = $region33
    $region32: #{tpu_custom_call.1} parent=1 // pred_region
      _
    $region33: #{tpu_custom_call.1} parent=1 // pred_fallthru
      _
    // Predicated region
    $region34: #{tpu_custom_call.1} parent=1 // pred_check
      _
    $region35: #{tpu_custom_call.1} parent=1 // pred_check_branch
      %55 = sbr.rel (0) target = $region37
    $region36: #{tpu_custom_call.1} parent=1 // pred_region
      %s57 = ssub.s32 1024, 1024
      %58 = vsyncadd [#allocation7], %s57
      %s59 = sshll.u32 [#allocation8], 4
      %s60 = int_to_ptr.vmem [resolvable:$true] %s59
      %65 = dma.hbm_to_vmem [thread:$0]  %s8, 1024, %s60, [#allocation7], 64, 64, 4
    $region37: #{tpu_custom_call.1} parent=1 // pred_fallthru
      _
    // Predicated region
    $region38: #{tpu_custom_call.1} parent=1 // pred_check
      _
    $region39: #{tpu_custom_call.1} parent=1 // pred_check_branch
      %67 = sbr.rel (0) target = $region41
    $region40: #{tpu_custom_call.1} parent=1 // pred_region
      _
    $region41: #{tpu_custom_call.1} parent=1 // pred_fallthru
      _
    // Predicated region
    $region42: #{tpu_custom_call.1} parent=1 // pred_check
      _
    $region43: #{tpu_custom_call.1} parent=1 // pred_check_branch
      %69 = sbr.rel (0) target = $region45
    $region44: #{tpu_custom_call.1} parent=1 // pred_region
      %70 = dma.done [#allocation5], 2048
    $region45: #{tpu_custom_call.1} parent=1 // pred_fallthru
      _
    // Predicated region
    $region46: #{tpu_custom_call.1} parent=1 // pred_check
      _
    $region47: #{tpu_custom_call.1} parent=1 // pred_check_branch
      %72 = sbr.rel (0) target = $region49
    $region48: #{tpu_custom_call.1} parent=1 // pred_region
      %73 = dma.done [#allocation7], 1024
    $region49: #{tpu_custom_call.1} parent=1 // pred_fallthru
      _
    // Predicated region
    $region50: #{tpu_custom_call.1} parent=1 // pred_check
      _
    $region51: #{tpu_custom_call.1} parent=1 // pred_check_branch
      %75 = sbr.rel (0) target = $region53
    $region52: #{tpu_custom_call.1} parent=1 // pred_region
      %76 = dma.done [#allocation7], 1024
    $region53: #{tpu_custom_call.1} parent=1 // pred_fallthru
      _
    %v78 = vld [vmem:[%s0] sm:$0xff]
    %v79 = vld [vmem:[%s0 + $0x8] sm:$0xff]
    %v80 = vpack.c.bf16 %v79, %v78
    %v81 = vld [vmem:[%s2] sm:$0xf]
    %v82 = vld [vmem:[%s2 + $0x4] sm:$0xf]
    %v83 = vld [vmem:[%s3] sm:$0x1]
    %v85 = vlaneseq
    %v86 = vshrl.u32 %v85, 7
    %v87 = vsub.s32 0, %v86
    %v88 = vrot.slane %v83, %v87
    %v92 = vunpack.c.l.b16 %v81
    %v93 = vunpack.c.l.b16 %v82
    %v94 = vpack.c.b16 %v93, %v92
    %vm96 = vcmask 130048
    %v98 = vsel %vm96, %v80, 0
    %100 = vmatprep.subr.bf16.mxu0 0
    %101 = vmatpush1.bf16.msra.mxu0 %v94
    %102 = vmatprep.subr.bf16.mxu0 0
    %103 = vmatpush1.bf16.msra.mxu0 0
    %104 = vmatprep.subr.bf16.mxu0 0
    %105 = vmatpush1.bf16.msra.mxu0 0
    %106 = vmatprep.subr.bf16.mxu0 0
    %107 = vmatpush1.bf16.msra.mxu0 0
    %108 = vmatprep.subr.bf16.mxu0 0
    %109 = vmatpush1.bf16.msra.mxu0 0
    %110 = vmatprep.subr.bf16.mxu0 0
    %111 = vmatpush1.bf16.msra.mxu0 0
    %112 = vmatprep.subr.bf16.mxu0 0
    %113 = vmatpush1.bf16.msra.mxu0 0
    %114 = vmatprep.subr.bf16.mxu0 0
    %115 = vmatpush1.bf16.msra.mxu0 0
    %116 = vmatprep.subr.bf16.mxu0 0
    %117 = vmatpush1.bf16.msra.mxu0 0
    %118 = vmatprep.subr.bf16.mxu0 0
    %119 = vmatpush1.bf16.msra.mxu0 0
    %120 = vmatprep.subr.bf16.mxu0 0
    %121 = vmatpush1.bf16.msra.mxu0 0
    %122 = vmatprep.subr.bf16.mxu0 0
    %123 = vmatpush1.bf16.msra.mxu0 0
    %124 = vmatprep.subr.bf16.mxu0 0
    %125 = vmatpush1.bf16.msra.mxu0 0
    %126 = vmatprep.subr.bf16.mxu0 0
    %127 = vmatpush1.bf16.msra.mxu0 0
    %128 = vmatprep.subr.bf16.mxu0 0
    %129 = vmatpush1.bf16.msra.mxu0 0
    %130 = vmatprep.subr.bf16.mxu0 0
    %131 = vmatpush1.bf16.msra.mxu0 0
    %132 = vmatprep.mubr.bf16.mxu0 0
    %133 = vmatmul.mubr.bf16.gmra.mrb[0].mxu0 %v98
    %v134 = vpop.f32.mrb[0].mxu0
    %v135 = vadd.f32 %v88, %v134
    %v136 = vpop.f32.mrb[0].mxu0
    %v137 = vpop.f32.mrb[0].mxu0
    %v138 = vadd.f32 %v88, %v137
    %v139 = vpop.f32.mrb[0].mxu0
    %140 = vdwg.mxu0
    %v141 = vmax.f32 %v135, 0.0
    %v142 = vmax.f32 %v138, 0.0
    %v143 = vpack.c.bf16 %v142, %v141
    %144 = vst [vmem:[#allocation2] sm:$0xff] %v143
    %vm145 = vcmask 1047584
    %146 = vst.msk [vmem:[#allocation2 + $0x8] sm:$0xff] %vm145, 0
    %v147 = vld [vmem:[%s1] sm:$0xff]
    %v148 = vld [vmem:[%s1 + $0x8] sm:$0xff]
    %v149 = vpack.c.bf16 %v148, %v147
    %vm150 = vcmask 31744
    %151 = vst.msk [vmem:[#allocation2 + $0x8] sm:$0xff] %vm150, %v149
    %v152 = vld [vmem:[#allocation2] sm:$0xff]
    %v153 = vld [vmem:[#allocation2 + $0x8] sm:$0xff]
    %v154 = vld [vmem:[#allocation4] sm:$0xf]
    %v155 = vld [vmem:[#allocation4 + $0x4] sm:$0xf]
    %v156 = vld [vmem:[#allocation4 + $0x8] sm:$0xf]
    %v157 = vld [vmem:[#allocation4 + $0xc] sm:$0xf]
    %v158 = vld [vmem:[#allocation4 + $0x10] sm:$0xf]
    %v159 = vld [vmem:[#allocation4 + $0x14] sm:$0xf]
    %v160 = vld [vmem:[#allocation4 + $0x18] sm:$0xf]
    %v161 = vld [vmem:[#allocation4 + $0x1c] sm:$0xf]
    %v162 = vld [vmem:[#allocation4 + $0x20] sm:$0xf]
    %v163 = vld [vmem:[#allocation4 + $0x24] sm:$0xf]
    %v164 = vld [vmem:[#allocation4 + $0x28] sm:$0xf]
    %v165 = vld [vmem:[#allocation4 + $0x2c] sm:$0xf]
    %v166 = vld [vmem:[#allocation4 + $0x30] sm:$0xf]
    %v167 = vld [vmem:[#allocation4 + $0x34] sm:$0xf]
    %v168 = vld [vmem:[#allocation4 + $0x38] sm:$0xf]
    %v169 = vld [vmem:[#allocation4 + $0x3c] sm:$0xf]
    %v170 = vld [vmem:[#allocation4 + $0x40] sm:$0xf]
    %v171 = vld [vmem:[#allocation4 + $0x44] sm:$0xf]
    %v172 = vld [vmem:[#allocation4 + $0x48] sm:$0xf]
    %v173 = vld [vmem:[#allocation4 + $0x4c] sm:$0xf]
    %v174 = vld [vmem:[#allocation4 + $0x50] sm:$0xf]
    %v175 = vld [vmem:[#allocation4 + $0x54] sm:$0xf]
    %v176 = vld [vmem:[#allocation4 + $0x58] sm:$0xf]
    %v177 = vld [vmem:[#allocation4 + $0x5c] sm:$0xf]
    %v178 = vld [vmem:[#allocation4 + $0x60] sm:$0xf]
    %v179 = vld [vmem:[#allocation4 + $0x64] sm:$0xf]
    %v180 = vld [vmem:[#allocation4 + $0x68] sm:$0xf]
    %v181 = vld [vmem:[#allocation4 + $0x6c] sm:$0xf]
    %v182 = vld [vmem:[#allocation4 + $0x70] sm:$0xf]
    %v183 = vld [vmem:[#allocation4 + $0x74] sm:$0xf]
    %v184 = vld [vmem:[#allocation4 + $0x78] sm:$0xf]
    %v185 = vld [vmem:[#allocation4 + $0x7c] sm:$0xf]
    %v186 = vld [vmem:[%s5] sm:$0x1]
    %v188 = vlaneseq
    %v189 = vshrl.u32 %v188, 7
    %v190 = vsub.s32 0, %v189
    %v191 = vrot.slane %v186, %v190
    %v225 = vunpack.c.l.b16 %v154
    %v226 = vunpack.c.l.b16 %v155
    %v227 = vunpack.c.l.b16 %v156
    %v228 = vunpack.c.l.b16 %v157
    %v229 = vunpack.c.l.b16 %v158
    %v230 = vunpack.c.l.b16 %v159
    %v231 = vunpack.c.l.b16 %v160
    %v232 = vunpack.c.l.b16 %v161
    %v233 = vunpack.c.l.b16 %v162
    %v234 = vunpack.c.l.b16 %v163
    %v235 = vunpack.c.l.b16 %v164
    %v236 = vunpack.c.l.b16 %v165
    %v237 = vunpack.c.l.b16 %v166
    %v238 = vunpack.c.l.b16 %v167
    %v239 = vunpack.c.l.b16 %v168
    %v240 = vunpack.c.l.b16 %v169
    %v241 = vunpack.c.l.b16 %v170
    %v242 = vunpack.c.l.b16 %v171
    %v243 = vunpack.c.l.b16 %v172
    %v244 = vunpack.c.l.b16 %v173
    %v245 = vunpack.c.l.b16 %v174
    %v246 = vunpack.c.l.b16 %v175
    %v247 = vunpack.c.l.b16 %v176
    %v248 = vunpack.c.l.b16 %v177
    %v249 = vunpack.c.l.b16 %v178
    %v250 = vunpack.c.l.b16 %v179
    %v251 = vunpack.c.l.b16 %v180
    %v252 = vunpack.c.l.b16 %v181
    %v253 = vunpack.c.l.b16 %v182
    %v254 = vunpack.c.l.b16 %v183
    %v255 = vunpack.c.l.b16 %v184
    %v256 = vunpack.c.l.b16 %v185
    %v257 = vpack.c.b16 %v226, %v225
    %v258 = vpack.c.b16 %v228, %v227
    %v259 = vpack.c.b16 %v230, %v229
    %v260 = vpack.c.b16 %v232, %v231
    %v261 = vpack.c.b16 %v234, %v233
    %v262 = vpack.c.b16 %v236, %v235
    %v263 = vpack.c.b16 %v238, %v237
    %v264 = vpack.c.b16 %v240, %v239
    %v265 = vpack.c.b16 %v242, %v241
    %v266 = vpack.c.b16 %v244, %v243
    %v267 = vpack.c.b16 %v246, %v245
    %v268 = vpack.c.b16 %v248, %v247
    %v269 = vpack.c.b16 %v250, %v249
    %v270 = vpack.c.b16 %v252, %v251
    %v271 = vpack.c.b16 %v254, %v253
    %v272 = vpack.c.b16 %v256, %v255
    %289 = vmatprep.subr.bf16.mxu0 0
    %290 = vmatpush1.bf16.msra.mxu0 %v257
    %291 = vmatprep.subr.bf16.mxu0 0
    %292 = vmatpush1.bf16.msra.mxu0 %v258
    %293 = vmatprep.subr.bf16.mxu0 0
    %294 = vmatpush1.bf16.msra.mxu0 %v259
    %295 = vmatprep.subr.bf16.mxu0 0
    %296 = vmatpush1.bf16.msra.mxu0 %v260
    %297 = vmatprep.subr.bf16.mxu0 0
    %298 = vmatpush1.bf16.msra.mxu0 %v261
    %299 = vmatprep.subr.bf16.mxu0 0
    %300 = vmatpush1.bf16.msra.mxu0 %v262
    %301 = vmatprep.subr.bf16.mxu0 0
    %302 = vmatpush1.bf16.msra.mxu0 %v263
    %303 = vmatprep.subr.bf16.mxu0 0
    %304 = vmatpush1.bf16.msra.mxu0 %v264
    %305 = vmatprep.subr.bf16.mxu0 0
    %306 = vmatpush1.bf16.msra.mxu0 %v265
    %307 = vmatprep.subr.bf16.mxu0 0
    %308 = vmatpush1.bf16.msra.mxu0 %v266
    %309 = vmatprep.subr.bf16.mxu0 0
    %310 = vmatpush1.bf16.msra.mxu0 %v267
    %311 = vmatprep.subr.bf16.mxu0 0
    %312 = vmatpush1.bf16.msra.mxu0 %v268
    %313 = vmatprep.subr.bf16.mxu0 0
    %314 = vmatpush1.bf16.msra.mxu0 %v269
    %315 = vmatprep.subr.bf16.mxu0 0
    %316 = vmatpush1.bf16.msra.mxu0 %v270
    %317 = vmatprep.subr.bf16.mxu0 0
    %318 = vmatpush1.bf16.msra.mxu0 %v271
    %319 = vmatprep.subr.bf16.mxu0 0
    %320 = vmatpush1.bf16.msra.mxu0 %v272
    %321 = vmatprep.mubr.bf16.mxu0 %v153
    %322 = vmatmul.mubr.bf16.gmra.mrb[0].mxu0 %v152
    %v323 = vpop.f32.mrb[0].mxu0
    %v324 = vadd.f32 %v191, %v323
    %v325 = vpop.f32.mrb[0].mxu0
    %v326 = vpop.f32.mrb[0].mxu0
    %v327 = vadd.f32 %v191, %v326
    %v328 = vpop.f32.mrb[0].mxu0
    %329 = vdwg.mxu0
    %v330 = vmax.f32 %v324, 0.0
    %v331 = vmax.f32 %v327, 0.0
    %v332 = vpack.c.bf16 %v331, %v330
    %v333 = vld [vmem:[#allocation6] sm:$0xf]
    %v334 = vld [vmem:[#allocation6 + $0x4] sm:$0xf]
    %v335 = vld [vmem:[#allocation6 + $0x8] sm:$0xf]
    %v336 = vld [vmem:[#allocation6 + $0xc] sm:$0xf]
    %v337 = vld [vmem:[#allocation6 + $0x10] sm:$0xf]
    %v338 = vld [vmem:[#allocation6 + $0x14] sm:$0xf]
    %v339 = vld [vmem:[#allocation6 + $0x18] sm:$0xf]
    %v340 = vld [vmem:[#allocation6 + $0x1c] sm:$0xf]
    %v341 = vld [vmem:[#allocation6 + $0x20] sm:$0xf]
    %v342 = vld [vmem:[#allocation6 + $0x24] sm:$0xf]
    %v343 = vld [vmem:[#allocation6 + $0x28] sm:$0xf]
    %v344 = vld [vmem:[#allocation6 + $0x2c] sm:$0xf]
    %v345 = vld [vmem:[#allocation6 + $0x30] sm:$0xf]
    %v346 = vld [vmem:[#allocation6 + $0x34] sm:$0xf]
    %v347 = vld [vmem:[#allocation6 + $0x38] sm:$0xf]
    %v348 = vld [vmem:[#allocation6 + $0x3c] sm:$0xf]
    %v349 = vld [vmem:[%s7] sm:$0x1]
    %v351 = vlaneseq
    %v352 = vshrl.u32 %v351, 7
    %v353 = vsub.s32 0, %v352
    %v354 = vrot.slane %v349, %v353
    %v372 = vunpack.c.l.b16 %v333
    %v373 = vunpack.c.l.b16 %v334
    %v374 = vunpack.c.l.b16 %v335
    %v375 = vunpack.c.l.b16 %v336
    %v376 = vunpack.c.l.b16 %v337
    %v377 = vunpack.c.l.b16 %v338
    %v378 = vunpack.c.l.b16 %v339
    %v379 = vunpack.c.l.b16 %v340
    %v380 = vunpack.c.l.b16 %v341
    %v381 = vunpack.c.l.b16 %v342
    %v382 = vunpack.c.l.b16 %v343
    %v383 = vunpack.c.l.b16 %v344
    %v384 = vunpack.c.l.b16 %v345
    %v385 = vunpack.c.l.b16 %v346
    %v386 = vunpack.c.l.b16 %v347
    %v387 = vunpack.c.l.b16 %v348
    %v388 = vpack.c.b16 %v373, %v372
    %v389 = vpack.c.b16 %v375, %v374
    %v390 = vpack.c.b16 %v377, %v376
    %v391 = vpack.c.b16 %v379, %v378
    %v392 = vpack.c.b16 %v381, %v380
    %v393 = vpack.c.b16 %v383, %v382
    %v394 = vpack.c.b16 %v385, %v384
    %v395 = vpack.c.b16 %v387, %v386
    %404 = vmatprep.subr.bf16.mxu0 0
    %405 = vmatpush1.bf16.msra.mxu0 %v388
    %406 = vmatprep.subr.bf16.mxu0 0
    %407 = vmatpush1.bf16.msra.mxu0 %v389
    %408 = vmatprep.subr.bf16.mxu0 0
    %409 = vmatpush1.bf16.msra.mxu0 %v390
    %410 = vmatprep.subr.bf16.mxu0 0
    %411 = vmatpush1.bf16.msra.mxu0 %v391
    %412 = vmatprep.subr.bf16.mxu0 0
    %413 = vmatpush1.bf16.msra.mxu0 %v392
    %414 = vmatprep.subr.bf16.mxu0 0
    %415 = vmatpush1.bf16.msra.mxu0 %v393
    %416 = vmatprep.subr.bf16.mxu0 0
    %417 = vmatpush1.bf16.msra.mxu0 %v394
    %418 = vmatprep.subr.bf16.mxu0 0
    %419 = vmatpush1.bf16.msra.mxu0 %v395
    %420 = vmatprep.subr.bf16.mxu0 0
    %421 = vmatpush1.bf16.msra.mxu0 0
    %422 = vmatprep.subr.bf16.mxu0 0
    %423 = vmatpush1.bf16.msra.mxu0 0
    %424 = vmatprep.subr.bf16.mxu0 0
    %425 = vmatpush1.bf16.msra.mxu0 0
    %426 = vmatprep.subr.bf16.mxu0 0
    %427 = vmatpush1.bf16.msra.mxu0 0
    %428 = vmatprep.subr.bf16.mxu0 0
    %429 = vmatpush1.bf16.msra.mxu0 0
    %430 = vmatprep.subr.bf16.mxu0 0
    %431 = vmatpush1.bf16.msra.mxu0 0
    %432 = vmatprep.subr.bf16.mxu0 0
    %433 = vmatpush1.bf16.msra.mxu0 0
    %434 = vmatprep.subr.bf16.mxu0 0
    %435 = vmatpush1.bf16.msra.mxu0 0
    %436 = vmatprep.mubr.bf16.mxu0 0
    %437 = vmatmul.mubr.bf16.gmra.mrb[0].mxu0 %v332
    %v438 = vpop.f32.mrb[0].mxu0
    %v439 = vadd.f32 %v354, %v438
    %v440 = vpop.f32.mrb[0].mxu0
    %v441 = vpop.f32.mrb[0].mxu0
    %v442 = vadd.f32 %v354, %v441
    %v443 = vpop.f32.mrb[0].mxu0
    %444 = vdwg.mxu0
    %v445 = vmax.f32 %v439, 0.0
    %v446 = vmax.f32 %v442, 0.0
    %v447 = vpack.c.bf16 %v446, %v445
    %v448 = vld [vmem:[#allocation8] sm:$0xf]
    %v449 = vld [vmem:[#allocation8 + $0x4] sm:$0xf]
    %v450 = vld [vmem:[#allocation8 + $0x8] sm:$0xf]
    %v451 = vld [vmem:[#allocation8 + $0xc] sm:$0xf]
    %v452 = vld [vmem:[#allocation8 + $0x10] sm:$0xf]
    %v453 = vld [vmem:[#allocation8 + $0x14] sm:$0xf]
    %v454 = vld [vmem:[#allocation8 + $0x18] sm:$0xf]
    %v455 = vld [vmem:[#allocation8 + $0x1c] sm:$0xf]
    %v456 = vld [vmem:[#allocation8 + $0x20] sm:$0xf]
    %v457 = vld [vmem:[#allocation8 + $0x24] sm:$0xf]
    %v458 = vld [vmem:[#allocation8 + $0x28] sm:$0xf]
    %v459 = vld [vmem:[#allocation8 + $0x2c] sm:$0xf]
    %v460 = vld [vmem:[#allocation8 + $0x30] sm:$0xf]
    %v461 = vld [vmem:[#allocation8 + $0x34] sm:$0xf]
    %v462 = vld [vmem:[#allocation8 + $0x38] sm:$0xf]
    %v463 = vld [vmem:[#allocation8 + $0x3c] sm:$0xf]
    %s464 = sld [smem:[#allocation3]]
    %v465 = vstv %s464
    %v482 = vunpack.c.l.b16 %v448
    %v483 = vunpack.c.l.b16 %v449
    %v484 = vunpack.c.l.b16 %v450
    %v485 = vunpack.c.l.b16 %v451
    %v486 = vunpack.c.l.b16 %v452
    %v487 = vunpack.c.l.b16 %v453
    %v488 = vunpack.c.l.b16 %v454
    %v489 = vunpack.c.l.b16 %v455
    %v490 = vunpack.c.l.b16 %v456
    %v491 = vunpack.c.l.b16 %v457
    %v492 = vunpack.c.l.b16 %v458
    %v493 = vunpack.c.l.b16 %v459
    %v494 = vunpack.c.l.b16 %v460
    %v495 = vunpack.c.l.b16 %v461
    %v496 = vunpack.c.l.b16 %v462
    %v497 = vunpack.c.l.b16 %v463
    %v498 = vpack.c.b16 %v483, %v482
    %v499 = vpack.c.b16 %v485, %v484
    %v500 = vpack.c.b16 %v487, %v486
    %v501 = vpack.c.b16 %v489, %v488
    %v502 = vpack.c.b16 %v491, %v490
    %v503 = vpack.c.b16 %v493, %v492
    %v504 = vpack.c.b16 %v495, %v494
    %v505 = vpack.c.b16 %v497, %v496
    %514 = vmatprep.subr.bf16.mxu0 0
    %515 = vmatpush1.bf16.msra.mxu0 %v498
    %516 = vmatprep.subr.bf16.mxu0 0
    %517 = vmatpush1.bf16.msra.mxu0 %v499
    %518 = vmatprep.subr.bf16.mxu0 0
    %519 = vmatpush1.bf16.msra.mxu0 %v500
    %520 = vmatprep.subr.bf16.mxu0 0
    %521 = vmatpush1.bf16.msra.mxu0 %v501
    %522 = vmatprep.subr.bf16.mxu0 0
    %523 = vmatpush1.bf16.msra.mxu0 %v502
    %524 = vmatprep.subr.bf16.mxu0 0
    %525 = vmatpush1.bf16.msra.mxu0 %v503
    %526 = vmatprep.subr.bf16.mxu0 0
    %527 = vmatpush1.bf16.msra.mxu0 %v504
    %528 = vmatprep.subr.bf16.mxu0 0
    %529 = vmatpush1.bf16.msra.mxu0 %v505
    %530 = vmatprep.subr.bf16.mxu0 0
    %531 = vmatpush1.bf16.msra.mxu0 0
    %532 = vmatprep.subr.bf16.mxu0 0
    %533 = vmatpush1.bf16.msra.mxu0 0
    %534 = vmatprep.subr.bf16.mxu0 0
    %535 = vmatpush1.bf16.msra.mxu0 0
    %536 = vmatprep.subr.bf16.mxu0 0
    %537 = vmatpush1.bf16.msra.mxu0 0
    %538 = vmatprep.subr.bf16.mxu0 0
    %539 = vmatpush1.bf16.msra.mxu0 0
    %540 = vmatprep.subr.bf16.mxu0 0
    %541 = vmatpush1.bf16.msra.mxu0 0
    %542 = vmatprep.subr.bf16.mxu0 0
    %543 = vmatpush1.bf16.msra.mxu0 0
    %544 = vmatprep.subr.bf16.mxu0 0
    %545 = vmatpush1.bf16.msra.mxu0 0
    %546 = vmatprep.mubr.bf16.mxu0 0
    %547 = vmatmul.mubr.bf16.gmra.mrb[0].mxu0 %v447
    %v548 = vpop.f32.mrb[0].mxu0
    %v549 = vadd.f32 %v465, %v548
    %v550 = vpop.f32.mrb[0].mxu0
    %v551 = vpop.f32.mrb[0].mxu0
    %v552 = vadd.f32 %v465, %v551
    %v553 = vpop.f32.mrb[0].mxu0
    %554 = vdwg.mxu0
    %vm555 = vcmask 7168
    %556 = vst.msk [vmem:[%s10] sm:$0xff] %vm555, %v549
    %557 = vst.msk [vmem:[%s10 + $0x8] sm:$0xff] %vm555, %v552
    // Predicated region
    $region54: #{tpu_custom_call.1} parent=1 // pred_check
      _
    $region55: #{tpu_custom_call.1} parent=1 // pred_check_branch
      %559 = sbr.rel (0) target = $region57
    $region56: #{tpu_custom_call.1} parent=1 // pred_region
      _
    $region57: #{tpu_custom_call.1} parent=1 // pred_fallthru
      _
    // Predicated region
    $region58: #{tpu_custom_call.1} parent=1 // pred_check
      _
    $region59: #{tpu_custom_call.1} parent=1 // pred_check_branch
      %561 = sbr.rel (0) target = $region61
    $region60: #{tpu_custom_call.1} parent=1 // pred_region
      _
    $region61: #{tpu_custom_call.1} parent=1 // pred_fallthru
      _
    %562 = vsyncpa [#allocation5], 1
    %563 = vsyncpa [#allocation7], 1

</llo_original>
